<compile_context>
chip_gen: v5e
topology: v5e:2x2
jax: 0.10.0
libtpu: 0.0.40
codegen_flags: <defaults>
</compile_context>

<pallas_src>
import functools

import jax
import jax.numpy as jnp
from jax.experimental import pallas as pl
from jax.experimental.pallas import tpu as pltpu

_LANES = 128
_NUM_SPLITS = 2  # leading "parallel" grid axis -> per-TensorCore partials on v7x


def _dice_kernel(pred_ref, target_ref, inter_out_ref, union_out_ref,
                 inter_acc, sum_acc, *, tile_rows, rows, tiles_per_split,
                 full_tiles, mask_needed):
    c = pl.program_id(0)            # split (TensorCore) index
    j = pl.program_id(1)            # tile index within this split
    gt = c * tiles_per_split + j    # global tile index

    @pl.when(j == 0)
    def _():
        inter_acc[...] = jnp.zeros_like(inter_acc)
        sum_acc[...] = jnp.zeros_like(sum_acc)

    x = pred_ref[...].astype(jnp.float32)
    t = target_ref[...].astype(jnp.float32)
    # sigmoid(x) = 0.5 * tanh(0.5 * x) + 0.5  -> single EUP transcendental.
    p = 0.5 * jnp.tanh(0.5 * x) + 0.5

    groups = tile_rows // 8

    def _accumulate(pv, tv):
        # Fold the (tile_rows, 128) contribution down to (8, 128) with VPU
        # vreg adds (the reshape only splits the leading dim and matches the
        # native (8, 128) tiling, so it is free).  Keeps the accumulator
        # read-modify-write to a single vreg per step.
        inter_acc[...] += jnp.sum((pv * tv).reshape(groups, 8, _LANES), axis=0)
        sum_acc[...] += jnp.sum((pv + tv).reshape(groups, 8, _LANES), axis=0)

    if mask_needed:
        # Only boundary/phantom tiles pay for the mask; interior tiles run
        # the unmasked path.
        @pl.when(gt < full_tiles)
        def _():
            _accumulate(p, t)

        @pl.when(gt >= full_tiles)
        def _():
            # Row-level validity (no global flat element index -> no int32
            # overflow for any realistic tensor).  vr <= 0 for phantom tiles,
            # masking them out entirely.  jnp.where discards any NaN garbage
            # from sigmoid of the unspecified boundary region.
            vr = rows - gt * tile_rows
            row = jax.lax.broadcasted_iota(jnp.int32, (tile_rows, _LANES), 0)
            valid = row < vr
            _accumulate(jnp.where(valid, p, 0.0), jnp.where(valid, t, 0.0))
    else:
        _accumulate(p, t)

    @pl.when(j == tiles_per_split - 1)
    def _():
        inter_out_ref[0] = inter_acc[...]
        union_out_ref[0] = sum_acc[...]


def dice_loss(pred, target, eps=1e-05):
    assert pred.shape == target.shape
    n = pred.size
    assert n > 0

    rows = pl.cdiv(n, _LANES)
    pred_flat = pred.reshape(-1)
    target_flat = target.reshape(-1)

    # Common case (n % 128 == 0, >= 8 rows): pure reshape, zero HBM copies.
    # Rare unaligned / tiny case: pad the tail so the 2D view exists; pred is
    # padded with the most negative finite value (sigmoid -> exactly 0) and
    # target with 0, so padded elements contribute exactly nothing.
    padded_rows = max(rows, 8)
    n_padded = padded_rows * _LANES
    if n_padded != n:
        if jnp.issubdtype(pred.dtype, jnp.floating):
            fill = jnp.finfo(pred.dtype).min
        elif jnp.issubdtype(pred.dtype, jnp.integer):
            fill = jnp.iinfo(pred.dtype).min
        else:
            fill = 0  # TODO(synk): boolean logits are nonsensical for sigmoid.
        pred_flat = jnp.pad(pred_flat, (0, n_padded - n), constant_values=fill)
        target_flat = jnp.pad(target_flat, (0, n_padded - n))
    rows = padded_rows

    pred_2d = pred_flat.reshape(rows, _LANES)
    target_2d = target_flat.reshape(rows, _LANES)

    # Block sizing: <= 4096 rows (2 MiB f32 working set per input block) and
    # <= ~4 MiB of raw input bytes per step.  Double-buffered inputs + f32
    # intermediates + tiny accumulators stay well under the 32 MiB scoped
    # limit on every generation (v7x physical VMEM is only 64 MiB).
    bytes_per_row = _LANES * (pred.dtype.itemsize + target.dtype.itemsize)
    budget_rows = max(8, ((4 * 1024 * 1024) // bytes_per_row) // 8 * 8)
    tile_rows = max(8, min(4096, budget_rows, (rows // 8) * 8))

    num_tiles = pl.cdiv(rows, tile_rows)
    full_tiles = rows // tile_rows           # tiles whose rows are all valid
    tiles_per_split = pl.cdiv(num_tiles, _NUM_SPLITS)
    grid = (_NUM_SPLITS, tiles_per_split)
    mask_needed = full_tiles < _NUM_SPLITS * tiles_per_split

    def in_map(c, j):
        # Phantom tiles (odd tile count) are clamped onto the last real tile;
        # their contribution is masked to zero in-kernel.
        return (jnp.minimum(c * tiles_per_split + j, num_tiles - 1), 0)

    kernel = functools.partial(
        _dice_kernel, tile_rows=tile_rows, rows=rows,
        tiles_per_split=tiles_per_split, full_tiles=full_tiles,
        mask_needed=mask_needed)

    inter_part, union_part = pl.pallas_call(
        kernel,
        out_shape=(jax.ShapeDtypeStruct((_NUM_SPLITS, 8, _LANES), jnp.float32),
                   jax.ShapeDtypeStruct((_NUM_SPLITS, 8, _LANES), jnp.float32)),
        grid_spec=pltpu.PrefetchScalarGridSpec(
            num_scalar_prefetch=0,
            grid=grid,
            in_specs=[
                pl.BlockSpec((tile_rows, _LANES), in_map),
                pl.BlockSpec((tile_rows, _LANES), in_map),
            ],
            out_specs=(
                pl.BlockSpec((1, 8, _LANES), lambda c, j: (c, 0, 0)),
                pl.BlockSpec((1, 8, _LANES), lambda c, j: (c, 0, 0)),
            ),
            scratch_shapes=[
                pltpu.VMEM((8, _LANES), jnp.float32),
                pltpu.VMEM((8, _LANES), jnp.float32),
            ],
        ),
        compiler_params=pltpu.CompilerParams(
            dimension_semantics=("parallel", "arbitrary"),
            vmem_limit_bytes=32 * 1024 * 1024,
        ),
    )(pred_2d, target_2d)

    intersection = jnp.sum(inter_part)
    union = jnp.sum(union_part)
    return 1.0 - (2.0 * intersection + eps) / (union + eps)


def dice_loss_ref(pred, target, eps=1e-05):
    p = jax.nn.sigmoid(pred.astype(jnp.float32))
    t = target.astype(jnp.float32)
    intersection = jnp.sum(p * t)
    union = jnp.sum(p) + jnp.sum(t)
    return 1.0 - (2.0 * intersection + eps) / (union + eps)


if __name__ == "__main__":
    key = jax.random.PRNGKey(0)
    k1, k2, k3, k4 = jax.random.split(key, 4)

    # Small NCHW segmentation-style logits/target pair (lane-aligned: no pad).
    pred = jax.random.normal(k1, (2, 4, 16, 16), dtype=jnp.float32)
    target = (jax.random.uniform(k2, (2, 4, 16, 16)) > 0.5).astype(jnp.float32)
    out = jax.block_until_ready(dice_loss(pred, target))
    ref = dice_loss_ref(pred, target)
    assert jnp.allclose(out, ref, atol=1e-5, rtol=1e-5), (out, ref)

    # Non-lane-aligned element count: exercises tail pad + boundary row mask.
    pred2 = jax.random.normal(k3, (3, 5, 7, 11), dtype=jnp.float32)
    target2 = (jax.random.uniform(k4, (3, 5, 7, 11)) > 0.5).astype(jnp.float32)
    out2 = jax.block_until_ready(dice_loss(pred2, target2))
    ref2 = dice_loss_ref(pred2, target2)
    assert jnp.allclose(out2, ref2, atol=1e-5, rtol=1e-5), (out2, ref2)

    # Narrow-dtype ingestion (bf16 logits): cast happens on the VPU in-kernel.
    pred3 = pred.astype(jnp.bfloat16)
    out3 = jax.block_until_ready(dice_loss(pred3, target))
    ref3 = dice_loss_ref(pred3, target)
    assert jnp.allclose(out3, ref3, atol=1e-4, rtol=1e-4), (out3, ref3)

    print("KERNEL_OK")
</pallas_src>

<mosaic_0001>
module attributes {stable_mosaic.version = 11 : i64} {
  func.func @_dice_kernel(%arg0: i32, %arg1: i32, %arg2: memref<16x128xf32, #tpu.memory_space<vmem>>, %arg3: memref<16x128xf32, #tpu.memory_space<vmem>>, %arg4: memref<1x8x128xf32, #tpu.memory_space<vmem>>, %arg5: memref<1x8x128xf32, #tpu.memory_space<vmem>>, %arg6: memref<8x128xf32, #tpu.memory_space<vmem>>, %arg7: memref<8x128xf32, #tpu.memory_space<vmem>>) attributes {dimension_semantics = [#tpu.dimension_semantics<parallel>, #tpu.dimension_semantics<arbitrary>], iteration_bounds = array<i64: 2, 1>, scalar_prefetch = 0 : i64, scratch_operands = 2 : i64, tpu.core_type = #tpu.core_type<tc>, window_params = [{transform_indices = @transform_0, window_bounds = array<i64: 16, 128>}, {transform_indices = @transform_1, window_bounds = array<i64: 16, 128>}, {transform_indices = @transform_2, window_bounds = array<i64: 1, 8, 128>}, {transform_indices = @transform_3, window_bounds = array<i64: 1, 8, 128>}]} {
    %c1_i32 = arith.constant 1 : i32
    %0 = arith.muli %arg0, %c1_i32 : i32
    %1 = arith.addi %0, %arg1 : i32
    %c0_i32 = arith.constant 0 : i32
    %2 = arith.cmpi eq, %arg1, %c0_i32 : i32
    %3 = arith.extui %2 : i1 to i32
    %c0_i32_0 = arith.constant 0 : i32
    %4 = arith.cmpi ne, %3, %c0_i32_0 : i32
    scf.if %4 {
      %cst_12 = arith.constant 0.000000e+00 : f32
      %23 = vector.broadcast %cst_12 : f32 to vector<8x128xf32>
      %c0_13 = arith.constant 0 : index
      %c0_14 = arith.constant 0 : index
      %24 = vector.load %arg6[%c0_13, %c0_14] : memref<8x128xf32, #tpu.memory_space<vmem>>, vector<8x128xf32>
      tpu.vector_store %arg6[%c0_13, %c0_14], %23 {strides = array<i32>} : memref<8x128xf32, #tpu.memory_space<vmem>>, vector<8x128xf32>,
      %cst_15 = arith.constant 0.000000e+00 : f32
      %25 = vector.broadcast %cst_15 : f32 to vector<8x128xf32>
      %c0_16 = arith.constant 0 : index
      %c0_17 = arith.constant 0 : index
      %26 = vector.load %arg7[%c0_16, %c0_17] : memref<8x128xf32, #tpu.memory_space<vmem>>, vector<8x128xf32>
      tpu.vector_store %arg7[%c0_16, %c0_17], %25 {strides = array<i32>} : memref<8x128xf32, #tpu.memory_space<vmem>>, vector<8x128xf32>,
    } else {
    }
    %c0 = arith.constant 0 : index
    %c0_1 = arith.constant 0 : index
    %5 = vector.load %arg2[%c0, %c0_1] : memref<16x128xf32, #tpu.memory_space<vmem>>, vector<16x128xf32>
    %c0_2 = arith.constant 0 : index
    %c0_3 = arith.constant 0 : index
    %6 = vector.load %arg3[%c0_2, %c0_3] : memref<16x128xf32, #tpu.memory_space<vmem>>, vector<16x128xf32>
    %cst = arith.constant 5.000000e-01 : f32
    %7 = vector.broadcast %cst : f32 to vector<16x128xf32>
    %8 = arith.mulf %7, %5 : vector<16x128xf32>
    %9 = math.tanh %8 : vector<16x128xf32>
    %cst_4 = arith.constant 5.000000e-01 : f32
    %10 = vector.broadcast %cst_4 : f32 to vector<16x128xf32>
    %11 = arith.mulf %10, %9 : vector<16x128xf32>
    %cst_5 = arith.constant 5.000000e-01 : f32
    %12 = vector.broadcast %cst_5 : f32 to vector<16x128xf32>
    %13 = arith.addf %11, %12 : vector<16x128xf32>
    %c1_i32_6 = arith.constant 1 : i32
    %14 = arith.cmpi slt, %1, %c1_i32_6 : i32
    %15 = arith.extui %14 : i1 to i32
    %c0_i32_7 = arith.constant 0 : i32
    %16 = arith.cmpi ne, %15, %c0_i32_7 : i32
    scf.if %16 {
      %c0_12 = arith.constant 0 : index
      %c0_13 = arith.constant 0 : index
      %23 = vector.load %arg6[%c0_12, %c0_13] : memref<8x128xf32, #tpu.memory_space<vmem>>, vector<8x128xf32>
      %24 = arith.mulf %13, %6 : vector<16x128xf32>
      %25 = vector.shape_cast %24 : vector<16x128xf32> to vector<2x8x128xf32>
      %cst_14 = arith.constant dense<0.000000e+00> : vector<8x128xf32>
      %26 = vector.multi_reduction <add>, %25, %cst_14 [0] : vector<2x8x128xf32> to vector<8x128xf32>
      %27 = arith.addf %23, %26 : vector<8x128xf32>
      %c0_15 = arith.constant 0 : index
      %c0_16 = arith.constant 0 : index
      %28 = vector.load %arg6[%c0_15, %c0_16] : memref<8x128xf32, #tpu.memory_space<vmem>>, vector<8x128xf32>
      tpu.vector_store %arg6[%c0_15, %c0_16], %27 {strides = array<i32>} : memref<8x128xf32, #tpu.memory_space<vmem>>, vector<8x128xf32>,
      %c0_17 = arith.constant 0 : index
      %c0_18 = arith.constant 0 : index
      %29 = vector.load %arg7[%c0_17, %c0_18] : memref<8x128xf32, #tpu.memory_space<vmem>>, vector<8x128xf32>
      %30 = arith.addf %13, %6 : vector<16x128xf32>
      %31 = vector.shape_cast %30 : vector<16x128xf32> to vector<2x8x128xf32>
      %cst_19 = arith.constant dense<0.000000e+00> : vector<8x128xf32>
      %32 = vector.multi_reduction <add>, %31, %cst_19 [0] : vector<2x8x128xf32> to vector<8x128xf32>
      %33 = arith.addf %29, %32 : vector<8x128xf32>
      %c0_20 = arith.constant 0 : index
      %c0_21 = arith.constant 0 : index
      %34 = vector.load %arg7[%c0_20, %c0_21] : memref<8x128xf32, #tpu.memory_space<vmem>>, vector<8x128xf32>
      tpu.vector_store %arg7[%c0_20, %c0_21], %33 {strides = array<i32>} : memref<8x128xf32, #tpu.memory_space<vmem>>, vector<8x128xf32>,
    } else {
    }
    %c1_i32_8 = arith.constant 1 : i32
    %17 = arith.cmpi sge, %1, %c1_i32_8 : i32
    %18 = arith.extui %17 : i1 to i32
    %c0_i32_9 = arith.constant 0 : i32
    %19 = arith.cmpi ne, %18, %c0_i32_9 : i32
    scf.if %19 {
      %c16_i32 = arith.constant 16 : i32
      %23 = arith.muli %1, %c16_i32 : i32
      %c16_i32_12 = arith.constant 16 : i32
      %24 = arith.subi %c16_i32_12, %23 : i32
      %25 = tpu.iota {dimensions = array<i32: 0>} : vector<16x128xi32>
      %26 = vector.broadcast %24 : i32 to vector<16x128xi32>
      %27 = arith.cmpi slt, %25, %26 : vector<16x128xi32>
      %cst_13 = arith.constant 0.000000e+00 : f32
      %28 = vector.broadcast %cst_13 : f32 to vector<16x128xf32>
      %29 = arith.select %27, %13, %28 : vector<16x128xi1>, vector<16x128xf32>
      %cst_14 = arith.constant 0.000000e+00 : f32
      %30 = vector.broadcast %cst_14 : f32 to vector<16x128xf32>
      %31 = arith.select %27, %6, %30 : vector<16x128xi1>, vector<16x128xf32>
      %c0_15 = arith.constant 0 : index
      %c0_16 = arith.constant 0 : index
      %32 = vector.load %arg6[%c0_15, %c0_16] : memref<8x128xf32, #tpu.memory_space<vmem>>, vector<8x128xf32>
      %33 = arith.mulf %29, %31 : vector<16x128xf32>
      %34 = vector.shape_cast %33 : vector<16x128xf32> to vector<2x8x128xf32>
      %cst_17 = arith.constant dense<0.000000e+00> : vector<8x128xf32>
      %35 = vector.multi_reduction <add>, %34, %cst_17 [0] : vector<2x8x128xf32> to vector<8x128xf32>
      %36 = arith.addf %32, %35 : vector<8x128xf32>
      %c0_18 = arith.constant 0 : index
      %c0_19 = arith.constant 0 : index
      %37 = vector.load %arg6[%c0_18, %c0_19] : memref<8x128xf32, #tpu.memory_space<vmem>>, vector<8x128xf32>
      tpu.vector_store %arg6[%c0_18, %c0_19], %36 {strides = array<i32>} : memref<8x128xf32, #tpu.memory_space<vmem>>, vector<8x128xf32>,
      %c0_20 = arith.constant 0 : index
      %c0_21 = arith.constant 0 : index
      %38 = vector.load %arg7[%c0_20, %c0_21] : memref<8x128xf32, #tpu.memory_space<vmem>>, vector<8x128xf32>
      %39 = arith.addf %29, %31 : vector<16x128xf32>
      %40 = vector.shape_cast %39 : vector<16x128xf32> to vector<2x8x128xf32>
      %cst_22 = arith.constant dense<0.000000e+00> : vector<8x128xf32>
      %41 = vector.multi_reduction <add>, %40, %cst_22 [0] : vector<2x8x128xf32> to vector<8x128xf32>
      %42 = arith.addf %38, %41 : vector<8x128xf32>
      %c0_23 = arith.constant 0 : index
      %c0_24 = arith.constant 0 : index
      %43 = vector.load %arg7[%c0_23, %c0_24] : memref<8x128xf32, #tpu.memory_space<vmem>>, vector<8x128xf32>
      tpu.vector_store %arg7[%c0_23, %c0_24], %42 {strides = array<i32>} : memref<8x128xf32, #tpu.memory_space<vmem>>, vector<8x128xf32>,
    } else {
    }
    %c0_i32_10 = arith.constant 0 : i32
    %20 = arith.cmpi eq, %arg1, %c0_i32_10 : i32
    %21 = arith.extui %20 : i1 to i32
    %c0_i32_11 = arith.constant 0 : i32
    %22 = arith.cmpi ne, %21, %c0_i32_11 : i32
    scf.if %22 {
      %c0_12 = arith.constant 0 : index
      %c0_13 = arith.constant 0 : index
      %23 = vector.load %arg6[%c0_12, %c0_13] : memref<8x128xf32, #tpu.memory_space<vmem>>, vector<8x128xf32>
      %c0_14 = arith.constant 0 : index
      %c0_15 = arith.constant 0 : index
      %c0_16 = arith.constant 0 : index
      %24 = vector.load %arg4[%c0_14, %c0_15, %c0_16] : memref<1x8x128xf32, #tpu.memory_space<vmem>>, vector<1x8x128xf32>
      %25 = vector.shape_cast %24 : vector<1x8x128xf32> to vector<8x128xf32>
      %26 = vector.shape_cast %23 : vector<8x128xf32> to vector<1x8x128xf32>
      tpu.vector_store %arg4[%c0_14, %c0_15, %c0_16], %26 {strides = array<i32>} : memref<1x8x128xf32, #tpu.memory_space<vmem>>, vector<1x8x128xf32>,
      %c0_17 = arith.constant 0 : index
      %c0_18 = arith.constant 0 : index
      %27 = vector.load %arg7[%c0_17, %c0_18] : memref<8x128xf32, #tpu.memory_space<vmem>>, vector<8x128xf32>
      %c0_19 = arith.constant 0 : index
      %c0_20 = arith.constant 0 : index
      %c0_21 = arith.constant 0 : index
      %28 = vector.load %arg5[%c0_19, %c0_20, %c0_21] : memref<1x8x128xf32, #tpu.memory_space<vmem>>, vector<1x8x128xf32>
      %29 = vector.shape_cast %28 : vector<1x8x128xf32> to vector<8x128xf32>
      %30 = vector.shape_cast %27 : vector<8x128xf32> to vector<1x8x128xf32>
      tpu.vector_store %arg5[%c0_19, %c0_20, %c0_21], %30 {strides = array<i32>} : memref<1x8x128xf32, #tpu.memory_space<vmem>>, vector<1x8x128xf32>,
    } else {
    }
    return
  }
  func.func @transform_0(%arg0: i32, %arg1: i32) -> (i32, i32) {
    %c1_i32 = arith.constant 1 : i32
    %0 = arith.muli %arg0, %c1_i32 : i32
    %1 = arith.addi %0, %arg1 : i32
    %c0_i32 = arith.constant 0 : i32
    %2 = arith.minsi %1, %c0_i32 : i32
    %c0_i32_0 = arith.constant 0 : i32
    %c0_i32_1 = arith.constant 0 : i32
    return %2, %c0_i32_0 : i32, i32
  }
  func.func @transform_1(%arg0: i32, %arg1: i32) -> (i32, i32) {
    %c1_i32 = arith.constant 1 : i32
    %0 = arith.muli %arg0, %c1_i32 : i32
    %1 = arith.addi %0, %arg1 : i32
    %c0_i32 = arith.constant 0 : i32
    %2 = arith.minsi %1, %c0_i32 : i32
    %c0_i32_0 = arith.constant 0 : i32
    %c0_i32_1 = arith.constant 0 : i32
    return %2, %c0_i32_0 : i32, i32
  }
  func.func @transform_2(%arg0: i32, %arg1: i32) -> (i32, i32, i32) {
    %c0_i32 = arith.constant 0 : i32
    %c0_i32_0 = arith.constant 0 : i32
    %c0_i32_1 = arith.constant 0 : i32
    return %arg0, %c0_i32, %c0_i32_0 : i32, i32, i32
  }
  func.func @transform_3(%arg0: i32, %arg1: i32) -> (i32, i32, i32) {
    %c0_i32 = arith.constant 0 : i32
    %c0_i32_0 = arith.constant 0 : i32
    %c0_i32_1 = arith.constant 0 : i32
    return %arg0, %c0_i32, %c0_i32_0 : i32, i32, i32
  }
}

</mosaic_0001>

<llo_original>
// kernel: tpu_custom_call.1
$region0: #{tpu_custom_call.1}
  #allocation0 [shape = 'u32[]', space=smem, size = 0x4, offset = 0x4, fixed_abs, tag = 'smem constant byte address 0x4 - core index']
  #allocation1 [shape = 'u32[72,128]{1,0:T(1,128)}', space=vmem, size = 0x9000, scoped, tag = 'internal scratch']
  #allocation2 [shape = 'f32[8,128]{1,0:T(8,128)}', space=vmem, size = 0x1000, scoped, tag = 'scratch operand']
  #allocation3 [shape = 'f32[8,128]{1,0:T(8,128)}', space=vmem, size = 0x1000, scoped, tag = 'scratch operand']
  %s0 = inlined_call_operand.hbm [shape: f32[16,128], index: 0, kind: input, shape index: {}]
  %s1 = inlined_call_operand.hbm [shape: f32[16,128], index: 1, kind: input, shape index: {}]
  %s2 = inlined_call_operand.hbm [shape: f32[2,8,128], index: 2, kind: output, shape index: {0}]
  %s3 = inlined_call_operand.hbm [shape: f32[2,8,128], index: 3, kind: output, shape index: {1}]
  %4 = xla_tuple %s2, %s3
  %s5 = sld [smem:[#allocation0]]
  $region73: #{tpu_custom_call.1} parent=0
    _
  %s7 = ssub.s32 1, %s5
  %s8 = scalar_select 0, %s7, %s5
  $region1: #{tpu_custom_call.1} parent=0
    #allocation4 [shape = 'u8[16384]{0}', space=vmem, size = 0x4000, scoped, tag = 'input window, operand 0']
    #allocation5 [shape = 's32[2]{0}', space=sflag, size = 0x8, scoped, tag = 'scoped memory for tpu_custom_call.1']
    #allocation6 [shape = 's32[2]{0}', space=sflag, size = 0x8, scoped, tag = 'scoped memory for tpu_custom_call.1']
    #allocation7 [shape = 'u8[16384]{0}', space=vmem, size = 0x4000, scoped, tag = 'input window, operand 1']
    #allocation8 [shape = 's32[2]{0}', space=sflag, size = 0x8, scoped, tag = 'scoped memory for tpu_custom_call.1']
    #allocation9 [shape = 'u8[8192]{0}', space=vmem, size = 0x2000, scoped, tag = 'output window, operand 0']
    #allocation10 [shape = 'u8[8192]{0}', space=vmem, size = 0x2000, scoped, tag = 'output window, operand 1']
    #allocation11 [shape = 's32[2]{0}', space=sflag, size = 0x8, scoped, tag = 'scoped memory for tpu_custom_call.1']
    %9 = vsyncpa [#allocation5], 0
    %s10 = scalar_lea.sflag [#allocation5], 1
    %11 = vsyncpa %s10, 0
    %12 = vsyncpa [#allocation8], 0
    %s13 = scalar_lea.sflag [#allocation8], 1
    %14 = vsyncpa %s13, 0
    %15 = vsyncpa [#allocation6], 0
    %s16 = scalar_lea.sflag [#allocation6], 1
    %17 = vsyncpa %s16, 0
    %18 = vsyncpa [#allocation11], 0
    %s19 = scalar_lea.sflag [#allocation11], 1
    %20 = vsyncpa %s19, 0
    loop: start=0, step=1, limit=4
    $region2: #{tpu_custom_call.1} parent=1 // loop_pre_header
      _
    $region3: #{tpu_custom_call.1} parent=1 // loop_header
      %s22 = sphi 0, %s26
      %p23 = scmp.ge.s32.totalorder %s22, 4
      %s29 = sphi 0, %s41
      %s30 = sphi 0, %s37
      %s31 = sphi 0, %s29
      %s32 = sphi 0, %s30
      %s33 = sphi 0, %s31
      %s34 = sphi 0, %s32
      %s50 = sphi 0, %s52
      %s53 = sphi 0, %s50
      %s54 = sphi 0, %s53
      %s70 = sphi 0, %s54
      %s82 = sphi 0, %s84
      %s85 = sphi 0, %s82
      %s86 = sphi 0, %s85
      %s102 = sphi 0, %s86
      %s108 = sphi 0, %s110
      %s111 = sphi 0, %s108
      %s112 = sphi 0, %s111
      %s128 = sphi 0, %s112
      %s134 = sphi 0, %s136
      %s137 = sphi 0, %s134
      %s138 = sphi 0, %s137
      %s154 = sphi 0, %s138
    $region4: #{tpu_custom_call.1} parent=1 // loop_header_branch
      %25 = sbr.rel (%p23) target = $region8
    $region5: #{tpu_custom_call.1} parent=1 // loop_body
      %s27 = ssub.s32 %s22, 1
      %s28 = ssub.s32 %s22, 2
      %s35 = sadd.s32 1, %s30
      %p36 = scmp.ge.s32.totalorder %s35, 1
      %s37 = scalar_select %p36, 0, %s35
      %s38 = sadd.s32 1, %s29
      %s39 = scalar_select %p36, %s38, %s29
      %p40 = scmp.ge.s32.totalorder %s39, 2
      %s41 = scalar_select %p40, 0, %s39
      %s42 = sadd.s32 %s29, %s30
      %p43 = scmp.lt.s32.totalorder %s42, 0
      %s44 = scalar_select %p43, %s42, 0
      %s45 = sadd.s32 %s41, %s37
      %p46 = scmp.lt.s32.totalorder %s45, 0
      %s47 = scalar_select %p46, %s45, 0
      %s48 = ssub.s32 %s44, %s47
      %p49 = scmp.eq.s32.totalorder %s48, 0
      %s51 = sadd.s32 %s50, 1
      %s52 = scalar_select %p49, %s50, %s51
      %p55 = pneg %p49
      %p56 = scmp.eq.s32.totalorder %s22, 1
      %p57 = por %p55, %p56
      %p58 = scmp.ne.s32.totalorder %s50, %s53
      %p59 = scmp.eq.s32.totalorder %s22, 0
      %p60 = por %p58, %p59
      %p61 = scmp.ne.s32.totalorder %s50, %s53
      %p62 = scmp.eq.s32.totalorder %s27, 1
      %p63 = por %p61, %p62
      %p64 = scmp.ne.s32.totalorder %s53, %s54
      %p65 = scmp.eq.s32.totalorder %s27, 0
      %p66 = por %p64, %p65
      %p67 = scmp.ne.s32.totalorder %s53, %s54
      %p68 = scmp.eq.s32.totalorder %s28, 1
      %p69 = por %p67, %p68
      %p71 = scmp.ne.s32.totalorder %s54, %s70
      %p72 = scmp.eq.s32.totalorder %s28, 0
      %p73 = por %p71, %p72
      %s74 = sadd.s32 %s29, %s30
      %p75 = scmp.lt.s32.totalorder %s74, 0
      %s76 = scalar_select %p75, %s74, 0
      %s77 = sadd.s32 %s41, %s37
      %p78 = scmp.lt.s32.totalorder %s77, 0
      %s79 = scalar_select %p78, %s77, 0
      %s80 = ssub.s32 %s76, %s79
      %p81 = scmp.eq.s32.totalorder %s80, 0
      %s83 = sadd.s32 %s82, 1
      %s84 = scalar_select %p81, %s82, %s83
      %p87 = pneg %p81
      %p88 = scmp.eq.s32.totalorder %s22, 1
      %p89 = por %p87, %p88
      %p90 = scmp.ne.s32.totalorder %s82, %s85
      %p91 = scmp.eq.s32.totalorder %s22, 0
      %p92 = por %p90, %p91
      %p93 = scmp.ne.s32.totalorder %s82, %s85
      %p94 = scmp.eq.s32.totalorder %s27, 1
      %p95 = por %p93, %p94
      %p96 = scmp.ne.s32.totalorder %s85, %s86
      %p97 = scmp.eq.s32.totalorder %s27, 0
      %p98 = por %p96, %p97
      %p99 = scmp.ne.s32.totalorder %s85, %s86
      %p100 = scmp.eq.s32.totalorder %s28, 1
      %p101 = por %p99, %p100
      %p103 = scmp.ne.s32.totalorder %s86, %s102
      %p104 = scmp.eq.s32.totalorder %s28, 0
      %p105 = por %p103, %p104
      %s106 = ssub.s32 %s29, %s41
      %p107 = scmp.eq.s32.totalorder %s106, 0
      %s109 = sadd.s32 %s108, 1
      %s110 = scalar_select %p107, %s108, %s109
      %p113 = pneg %p107
      %p114 = scmp.eq.s32.totalorder %s22, 1
      %p115 = por %p113, %p114
      %p116 = scmp.ne.s32.totalorder %s108, %s111
      %p117 = scmp.eq.s32.totalorder %s22, 0
      %p118 = por %p116, %p117
      %p119 = scmp.ne.s32.totalorder %s108, %s111
      %p120 = scmp.eq.s32.totalorder %s27, 1
      %p121 = por %p119, %p120
      %p122 = scmp.ne.s32.totalorder %s111, %s112
      %p123 = scmp.eq.s32.totalorder %s27, 0
      %p124 = por %p122, %p123
      %p125 = scmp.ne.s32.totalorder %s111, %s112
      %p126 = scmp.eq.s32.totalorder %s28, 1
      %p127 = por %p125, %p126
      %p129 = scmp.ne.s32.totalorder %s112, %s128
      %p130 = scmp.eq.s32.totalorder %s28, 0
      %p131 = por %p129, %p130
      %s132 = ssub.s32 %s29, %s41
      %p133 = scmp.eq.s32.totalorder %s132, 0
      %s135 = sadd.s32 %s134, 1
      %s136 = scalar_select %p133, %s134, %s135
      %p139 = pneg %p133
      %p140 = scmp.eq.s32.totalorder %s22, 1
      %p141 = por %p139, %p140
      %p142 = scmp.ne.s32.totalorder %s134, %s137
      %p143 = scmp.eq.s32.totalorder %s22, 0
      %p144 = por %p142, %p143
      %p145 = scmp.ne.s32.totalorder %s134, %s137
      %p146 = scmp.eq.s32.totalorder %s27, 1
      %p147 = por %p145, %p146
      %p148 = scmp.ne.s32.totalorder %s137, %s138
      %p149 = scmp.eq.s32.totalorder %s27, 0
      %p150 = por %p148, %p149
      %p151 = scmp.ne.s32.totalorder %s137, %s138
      %p152 = scmp.eq.s32.totalorder %s28, 1
      %p153 = por %p151, %p152
      %p155 = scmp.ne.s32.totalorder %s138, %s154
      %p156 = scmp.eq.s32.totalorder %s28, 0
      %p157 = por %p155, %p156
      %p158 = scmp.le.s32.totalorder 1, %s22
      %p159 = scmp.lt.s32.totalorder %s22, 3
      %p160 = pnand %p158, %p159
      %p161 = pneg %p160
      // Predicated region
      $region9: #{tpu_custom_call.1} parent=5 // pred_check
        _
      $region10: #{tpu_custom_call.1} parent=5 // pred_check_branch
        %163 = sbr.rel (%p160) target = $region12
      $region11: #{tpu_custom_call.1} parent=5 // pred_region
        %s164 = ssub.s32 %s22, 1
      $region12: #{tpu_custom_call.1} parent=5 // pred_fallthru
        _
      %p165 = scmp.lt.s32.totalorder %s22, 2
      // Predicated region
      $region13: #{tpu_custom_call.1} parent=5 // pred_check
        %p166 = pneg %p165
      $region14: #{tpu_custom_call.1} parent=5 // pred_check_branch
        %168 = sbr.rel (%p166) target = $region16
      $region15: #{tpu_custom_call.1} parent=5 // pred_region
        // Predicated region
        $region17: #{tpu_custom_call.1} parent=15 // pred_check
          %p169 = pneg %p60
        $region18: #{tpu_custom_call.1} parent=15 // pred_check_branch
          %171 = sbr.rel (%p169) target = $region20
        $region19: #{tpu_custom_call.1} parent=15 // pred_region
          %s172 = sand.u32 %s50, 1
          %s173 = scalar_lea.sflag [#allocation5], %s172
          %s174 = sand.u32 %s50, 1
          %s175 = smul.addr %s174, 16
          %s176 = scalar_lea.vmem [#allocation4], %s175
          %s177 = sadd.s32 %s29, %s30
          %p178 = scmp.lt.s32.totalorder %s177, 0
          %s179 = scalar_select %p178, %s177, 0
          %s180 = smul.u32 2, %s179
          %182 = vsyncadd %s173, 0
          %s183 = smul.addr %s180, 8
          %s184 = scalar_lea.hbm %s0, %s183
          %s185 = sshll.u32 %s184, 4
          %s186 = int_to_ptr.hbm [resolvable:$true] %s185
          %s187 = sshll.u32 %s176, 4
          %s188 = int_to_ptr.vmem [resolvable:$true] %s187
          %193 = dma.hbm_to_vmem [thread:$0]  %s186, 256, %s188, %s173, 128, 128, 8
        $region20: #{tpu_custom_call.1} parent=15 // pred_fallthru
          _
        // Predicated region
        $region21: #{tpu_custom_call.1} parent=15 // pred_check
          %p194 = pneg %p92
        $region22: #{tpu_custom_call.1} parent=15 // pred_check_branch
          %196 = sbr.rel (%p194) target = $region24
        $region23: #{tpu_custom_call.1} parent=15 // pred_region
          %s197 = sand.u32 %s82, 1
          %s198 = scalar_lea.sflag [#allocation8], %s197
          %s199 = sand.u32 %s82, 1
          %s200 = smul.addr %s199, 16
          %s201 = scalar_lea.vmem [#allocation7], %s200
          %s202 = sadd.s32 %s29, %s30
          %p203 = scmp.lt.s32.totalorder %s202, 0
          %s204 = scalar_select %p203, %s202, 0
          %s205 = smul.u32 2, %s204
          %207 = vsyncadd %s198, 0
          %s208 = smul.addr %s205, 8
          %s209 = scalar_lea.hbm %s1, %s208
          %s210 = sshll.u32 %s209, 4
          %s211 = int_to_ptr.hbm [resolvable:$true] %s210
          %s212 = sshll.u32 %s201, 4
          %s213 = int_to_ptr.vmem [resolvable:$true] %s212
          %218 = dma.hbm_to_vmem [thread:$0]  %s211, 256, %s213, %s198, 128, 128, 8
        $region24: #{tpu_custom_call.1} parent=15 // pred_fallthru
          _
      $region16: #{tpu_custom_call.1} parent=5 // pred_fallthru
        _
      %p219 = scmp.le.s32.totalorder 1, %s22
      %p220 = scmp.lt.s32.totalorder %s22, 3
      %p221 = pnand %p219, %p220
      %p222 = pneg %p221
      // Predicated region
      $region25: #{tpu_custom_call.1} parent=5 // pred_check
        _
      $region26: #{tpu_custom_call.1} parent=5 // pred_check_branch
        %224 = sbr.rel (%p221) target = $region28
      $region27: #{tpu_custom_call.1} parent=5 // pred_region
        %s225 = ssub.s32 %s22, 1
        %s226 = sand.u32 %s53, 1
        %s227 = scalar_lea.sflag [#allocation5], %s226
        %s228 = sand.u32 %s53, 1
        %s229 = smul.addr %s228, 16
        %s230 = scalar_lea.vmem [#allocation4], %s229
        // Predicated region
        $region29: #{tpu_custom_call.1} parent=27 // pred_check
          %p231 = pneg %p66
        $region30: #{tpu_custom_call.1} parent=27 // pred_check_branch
          %233 = sbr.rel (%p231) target = $region32
        $region31: #{tpu_custom_call.1} parent=27 // pred_region
          %235 = dma.done %s227, 256
        $region32: #{tpu_custom_call.1} parent=27 // pred_fallthru
          _
        %s236 = sand.u32 %s85, 1
        %s237 = scalar_lea.sflag [#allocation8], %s236
        %s238 = sand.u32 %s85, 1
        %s239 = smul.addr %s238, 16
        %s240 = scalar_lea.vmem [#allocation7], %s239
        // Predicated region
        $region33: #{tpu_custom_call.1} parent=27 // pred_check
          %p241 = pneg %p98
        $region34: #{tpu_custom_call.1} parent=27 // pred_check_branch
          %243 = sbr.rel (%p241) target = $region36
        $region35: #{tpu_custom_call.1} parent=27 // pred_region
          %245 = dma.done %s237, 256
        $region36: #{tpu_custom_call.1} parent=27 // pred_fallthru
          _
        %s246 = sand.u32 %s53, 1
        %s247 = scalar_lea.sflag [#allocation5], %s246
        %s248 = sand.u32 %s53, 1
        %s249 = smul.addr %s248, 16
        %s250 = scalar_lea.vmem [#allocation4], %s249
        %p251 = pneg %p66
        %p252 = pneg %p63
        %s253 = sand.u32 %s85, 1
        %s254 = scalar_lea.sflag [#allocation8], %s253
        %s255 = sand.u32 %s85, 1
        %s256 = smul.addr %s255, 16
        %s257 = scalar_lea.vmem [#allocation7], %s256
        %p258 = pneg %p98
        %p259 = pneg %p95
        %p260 = pneg %p124
        %p261 = pneg %p121
        %s262 = sand.u32 %s111, 1
        %s263 = scalar_lea.sflag [#allocation6], %s262
        %s264 = sand.u32 %s111, 1
        %s265 = smul.addr %s264, 8
        %s266 = scalar_lea.vmem [#allocation9], %s265
        %p267 = pneg %p150
        %p268 = pneg %p147
        %s269 = sand.u32 %s137, 1
        %s270 = scalar_lea.sflag [#allocation11], %s269
        %s271 = sand.u32 %s137, 1
        %s272 = smul.addr %s271, 8
        %s273 = scalar_lea.vmem [#allocation10], %s272
        %s274 = sadd.s32 %s31, %s32
        %p275 = scmp.lt.s32.totalorder %s274, 0
        %s276 = scalar_select %p275, %s274, 0
        %s277 = smul.u32 2, %s276
        %s278 = sadd.s32 %s31, %s32
        %p279 = scmp.lt.s32.totalorder %s278, 0
        %s280 = scalar_select %p279, %s278, 0
        %s281 = smul.u32 2, %s280
        %s282 = sadd.s32 %s31, %s32
        %p283 = scmp.eq.s32.totalorder %s32, 0
        // Predicated region
        $region37: #{tpu_custom_call.1} parent=27 // pred_check
          %p284 = pneg %p283
        $region38: #{tpu_custom_call.1} parent=27 // pred_check_branch
          %286 = sbr.rel (%p284) target = $region40
        $region39: #{tpu_custom_call.1} parent=27 // pred_region
          %287 = vst [vmem:[#allocation2] sm:$0xff] 0.0
          %288 = vst [vmem:[#allocation3] sm:$0xff] 0.0
        $region40: #{tpu_custom_call.1} parent=27 // pred_fallthru
          _
        %v289 = vld [vmem:[%s230] sm:$0xff]
        %v290 = vld [vmem:[%s230 + $0x8] sm:$0xff]
        %v291 = vld [vmem:[%s240] sm:$0xff]
        %v292 = vld [vmem:[%s240 + $0x8] sm:$0xff]
        %v293 = vmul.f32 %v289, 0.5
        %v294 = vmul.f32 %v290, 0.5
        %v295 = vtanh.pop %v293
        %v296 = vtanh.pop %v294
        %v297 = vmul.f32 %v295, 0.5
        %v298 = vmul.f32 %v296, 0.5
        %v299 = vadd.f32 %v297, 0.5
        %v300 = vadd.f32 %v298, 0.5
        %p301 = scmp.lt.s32.totalorder %s282, 1
        // Predicated region
        $region41: #{tpu_custom_call.1} parent=27 // pred_check
          %p302 = pneg %p301
        $region42: #{tpu_custom_call.1} parent=27 // pred_check_branch
          %304 = sbr.rel (%p302) target = $region44
        $region43: #{tpu_custom_call.1} parent=27 // pred_region
          %v305 = vld [vmem:[#allocation2] sm:$0xff]
          %v306 = vmul.f32 %v299, %v291
          %v307 = vmul.f32 %v300, %v292
          %v308 = vadd.f32 %v306, %v307
          %v309 = vadd.f32 %v305, %v308
          %310 = vst [vmem:[#allocation2] sm:$0xff] %v309
          %v311 = vld [vmem:[#allocation3] sm:$0xff]
          %v312 = vadd.f32 %v299, %v291
          %v313 = vadd.f32 %v300, %v292
          %v314 = vadd.f32 %v312, %v313
          %v315 = vadd.f32 %v311, %v314
          %316 = vst [vmem:[#allocation3] sm:$0xff] %v315
        $region44: #{tpu_custom_call.1} parent=27 // pred_fallthru
          _
        %p317 = scmp.ge.s32.totalorder %s282, 1
        // Predicated region
        $region45: #{tpu_custom_call.1} parent=27 // pred_check
          %p318 = pneg %p317
        $region46: #{tpu_custom_call.1} parent=27 // pred_check_branch
          %320 = sbr.rel (%p318) target = $region48
        $region47: #{tpu_custom_call.1} parent=27 // pred_region
          %s321 = smul.u32 %s282, 16
          %s322 = ssub.s32 16, %s321
          %v323 = vlaneseq
          %v324 = vshrl.u32 %v323, 7
          %v325 = vadd.s32 %v324, 8
          %v326 = vstv %s322
          %vm327 = vcmp.lt.s32.totalorder %v324, %v326
          %vm328 = vcmp.lt.s32.totalorder %v325, %v326
          %v329 = vsel %vm327, %v299, 0.0
          %v330 = vsel %vm328, %v300, 0.0
          %v331 = vsel %vm327, %v291, 0.0
          %v332 = vsel %vm328, %v292, 0.0
          %v333 = vld [vmem:[#allocation2] sm:$0xff]
          %v334 = vmul.f32 %v329, %v331
          %v335 = vmul.f32 %v330, %v332
          %v336 = vadd.f32 %v334, %v335
          %v337 = vadd.f32 %v333, %v336
          %338 = vst [vmem:[#allocation2] sm:$0xff] %v337
          %v339 = vld [vmem:[#allocation3] sm:$0xff]
          %v340 = vadd.f32 %v329, %v331
          %v341 = vadd.f32 %v330, %v332
          %v342 = vadd.f32 %v340, %v341
          %v343 = vadd.f32 %v339, %v342
          %344 = vst [vmem:[#allocation3] sm:$0xff] %v343
        $region48: #{tpu_custom_call.1} parent=27 // pred_fallthru
          _
        // Predicated region
        $region49: #{tpu_custom_call.1} parent=27 // pred_check
          %p345 = pneg %p283
        $region50: #{tpu_custom_call.1} parent=27 // pred_check_branch
          %347 = sbr.rel (%p345) target = $region52
        $region51: #{tpu_custom_call.1} parent=27 // pred_region
          %v348 = vld [vmem:[#allocation2] sm:$0xff]
          %349 = vst [vmem:[%s266] sm:$0xff] %v348
          %v350 = vld [vmem:[#allocation3] sm:$0xff]
          %351 = vst [vmem:[%s273] sm:$0xff] %v350
        $region52: #{tpu_custom_call.1} parent=27 // pred_fallthru
          _
        %s352 = sand.u32 %s111, 1
        %s353 = scalar_lea.sflag [#allocation6], %s352
        %s354 = sand.u32 %s111, 1
        %s355 = smul.addr %s354, 8
        %s356 = scalar_lea.vmem [#allocation9], %s355
        %s357 = sand.u32 %s137, 1
        %s358 = scalar_lea.sflag [#allocation11], %s357
        %s359 = sand.u32 %s137, 1
        %s360 = smul.addr %s359, 8
        %s361 = scalar_lea.vmem [#allocation10], %s360
        // Predicated region
        $region53: #{tpu_custom_call.1} parent=27 // pred_check
          %p362 = pneg %p121
        $region54: #{tpu_custom_call.1} parent=27 // pred_check_branch
          %364 = sbr.rel (%p362) target = $region56
        $region55: #{tpu_custom_call.1} parent=27 // pred_region
          %366 = vsyncadd %s353, 0
          %s367 = smul.addr %s31, 8
          %s368 = scalar_lea.hbm %s2, %s367
          %s370 = sshll.u32 %s356, 4
          %s371 = int_to_ptr.vmem [resolvable:$true] %s370
          %s372 = sshll.u32 %s368, 4
          %s373 = int_to_ptr.hbm [resolvable:$true] %s372
          %375 = dma.vmem_to_hbm [thread:$0]  %s371, 128, %s373, %s353
        $region56: #{tpu_custom_call.1} parent=27 // pred_fallthru
          _
        // Predicated region
        $region57: #{tpu_custom_call.1} parent=27 // pred_check
          %p376 = pneg %p147
        $region58: #{tpu_custom_call.1} parent=27 // pred_check_branch
          %378 = sbr.rel (%p376) target = $region60
        $region59: #{tpu_custom_call.1} parent=27 // pred_region
          %380 = vsyncadd %s358, 0
          %s381 = smul.addr %s31, 8
          %s382 = scalar_lea.hbm %s3, %s381
          %s384 = sshll.u32 %s361, 4
          %s385 = int_to_ptr.vmem [resolvable:$true] %s384
          %s386 = sshll.u32 %s382, 4
          %s387 = int_to_ptr.hbm [resolvable:$true] %s386
          %389 = dma.vmem_to_hbm [thread:$0]  %s385, 128, %s387, %s358
        $region60: #{tpu_custom_call.1} parent=27 // pred_fallthru
          _
      $region28: #{tpu_custom_call.1} parent=5 // pred_fallthru
        _
      %p390 = scmp.le.s32.totalorder 2, %s22
      // Predicated region
      $region61: #{tpu_custom_call.1} parent=5 // pred_check
        %p391 = pneg %p390
      $region62: #{tpu_custom_call.1} parent=5 // pred_check_branch
        %393 = sbr.rel (%p391) target = $region64
      $region63: #{tpu_custom_call.1} parent=5 // pred_region
        %s394 = ssub.s32 %s22, 2
        // Predicated region
        $region65: #{tpu_custom_call.1} parent=63 // pred_check
          %p395 = pneg %p127
        $region66: #{tpu_custom_call.1} parent=63 // pred_check_branch
          %397 = sbr.rel (%p395) target = $region68
        $region67: #{tpu_custom_call.1} parent=63 // pred_region
          %s398 = sand.u32 %s112, 1
          %s399 = scalar_lea.sflag [#allocation6], %s398
          %s400 = sand.u32 %s112, 1
          %s401 = smul.addr %s400, 8
          %s402 = scalar_lea.vmem [#allocation9], %s401
          %404 = dma.done %s399, 128
        $region68: #{tpu_custom_call.1} parent=63 // pred_fallthru
          _
        // Predicated region
        $region69: #{tpu_custom_call.1} parent=63 // pred_check
          %p405 = pneg %p153
        $region70: #{tpu_custom_call.1} parent=63 // pred_check_branch
          %407 = sbr.rel (%p405) target = $region72
        $region71: #{tpu_custom_call.1} parent=63 // pred_region
          %s408 = sand.u32 %s138, 1
          %s409 = scalar_lea.sflag [#allocation11], %s408
          %s410 = sand.u32 %s138, 1
          %s411 = smul.addr %s410, 8
          %s412 = scalar_lea.vmem [#allocation10], %s411
          %414 = dma.done %s409, 128
        $region72: #{tpu_custom_call.1} parent=63 // pred_fallthru
          _
      $region64: #{tpu_custom_call.1} parent=5 // pred_fallthru
        _
    $region6: #{tpu_custom_call.1} parent=1 // loop_footer
      %s26 = sadd.s32 1, %s22
    $region7: #{tpu_custom_call.1} parent=1 // loop_footer_branch
      %21 = sbr.rel target = $region3
    $region8: #{tpu_custom_call.1} parent=1 // loop_exit
      _
    %415 = vsyncpa [#allocation5], 1
    %s416 = scalar_lea.sflag [#allocation5], 1
    %417 = vsyncpa %s416, 1
    %418 = vsyncpa [#allocation8], 1
    %s419 = scalar_lea.sflag [#allocation8], 1
    %420 = vsyncpa %s419, 1
    %421 = vsyncpa [#allocation6], 1
    %s422 = scalar_lea.sflag [#allocation6], 1
    %423 = vsyncpa %s422, 1
    %424 = vsyncpa [#allocation11], 1
    %s425 = scalar_lea.sflag [#allocation11], 1
    %426 = vsyncpa %s425, 1

</llo_original>
